<compile_context>
chip_gen: v5e
topology: v5e:2x2
jax: 0.10.0
libtpu: 0.0.40
codegen_flags: <defaults>
</compile_context>

<pallas_src>
import jax
import jax.numpy as jnp
from jax.experimental import pallas as pl
from jax.experimental.pallas import tpu as pltpu


def _swish_kernel(x_ref, o_ref):
    xf = x_ref[...].astype(jnp.float32)            # single cast to f32
    # sigmoid(x) = 1 / (1 + exp(-x)); exp and approximate reciprocal both run
    # on the EUP slot (free relative to the VALU) — kernel stays HBM-bound.
    sig = pl.reciprocal(1.0 + jnp.exp(-xf), approx=True)
    o_ref[...] = (xf * sig).astype(o_ref.dtype)


def swish(x, *, block_rows=4096, lanes=128):
    """Elementwise swish / SiLU for any shape.

    The flat buffer is viewed as a lane-dense (rows, 128) slab.  Padding is
    only added when x.size is not a multiple of 128 (one partial row); the
    partial *grid* block at the end is handled by Pallas edge masking, so no
    padding to a full block is ever materialized.
    """
    orig_shape = x.shape
    orig_dtype = x.dtype
    n = x.size

    rows = pl.cdiv(n, lanes)
    pad = rows * lanes - n                     # 0 whenever n % 128 == 0
    flat = x.reshape(-1)
    if pad:
        # swish(0) == 0, so zero padding of the last partial row is safe.
        flat = jnp.pad(flat, (0, pad))
    x2d = flat.reshape(rows, lanes)

    if rows <= block_rows:
        # Small input: one block covering the whole slab (full-array block is
        # exempt from the (8,128) divisibility rule) — no per-step overhead.
        block_shape = (rows, lanes)
        grid = (1,)
    else:
        # Large input: 2 MiB f32 blocks; 4 x block (in+out, double-buffered)
        # = 8 MiB, within the default scoped VMEM on v5e/v6e/v7x, so no
        # vmem_limit_bytes override is needed.  Ragged final block is masked.
        block_shape = (block_rows, lanes)
        grid = (pl.cdiv(rows, block_rows),)

    out2d = pl.pallas_call(
        _swish_kernel,
        out_shape=jax.ShapeDtypeStruct((rows, lanes), orig_dtype),
        grid_spec=pltpu.PrefetchScalarGridSpec(
            num_scalar_prefetch=0,
            grid=grid,
            in_specs=[pl.BlockSpec(block_shape, lambda i: (i, 0))],
            out_specs=pl.BlockSpec(block_shape, lambda i: (i, 0)),
        ),
        compiler_params=pltpu.CompilerParams(
            dimension_semantics=("parallel",)),   # shards across v7x's 2 TCs
    )(x2d)

    out_flat = out2d.reshape(-1)
    if pad:
        out_flat = out_flat[:n]                # only touched in the ragged case
    return out_flat.reshape(orig_shape)


if __name__ == "__main__":
    key = jax.random.PRNGKey(0)
    # NCHW input like the PyTorch module: batch=2, channels=4, spatial=16x16
    x = jax.random.normal(key, (2, 4, 16, 16), dtype=jnp.float32)

    y = jax.block_until_ready(swish(x))

    # reference check (plain JAX); tolerance accounts for the EUP approximate
    # reciprocal used for the sigmoid denominator.
    y_ref = x * jax.nn.sigmoid(x)
    assert y.shape == x.shape and y.dtype == x.dtype
    assert jnp.allclose(y, y_ref, atol=5e-3, rtol=5e-3), float(
        jnp.max(jnp.abs(y - y_ref)))

    print("KERNEL_OK")
</pallas_src>

<mosaic_0001>
module attributes {stable_mosaic.version = 11 : i64} {
  func.func @_swish_kernel(%arg0: i32, %arg1: memref<16x128xf32, #tpu.memory_space<vmem>>, %arg2: memref<16x128xf32, #tpu.memory_space<vmem>>) attributes {dimension_semantics = [#tpu.dimension_semantics<parallel>], iteration_bounds = array<i64: 1>, scalar_prefetch = 0 : i64, scratch_operands = 0 : i64, tpu.core_type = #tpu.core_type<tc>, window_params = [{transform_indices = @transform_0, window_bounds = array<i64: 16, 128>}, {transform_indices = @transform_1, window_bounds = array<i64: 16, 128>}]} {
    %c0 = arith.constant 0 : index
    %c0_0 = arith.constant 0 : index
    %0 = vector.load %arg1[%c0, %c0_0] : memref<16x128xf32, #tpu.memory_space<vmem>>, vector<16x128xf32>
    %cst = arith.constant 0.000000e+00 : f32
    %1 = vector.broadcast %cst : f32 to vector<16x128xf32>
    %2 = arith.subf %1, %0 : vector<16x128xf32>
    %3 = math.exp %2 : vector<16x128xf32>
    %cst_1 = arith.constant 1.000000e+00 : f32
    %4 = vector.broadcast %cst_1 : f32 to vector<16x128xf32>
    %5 = arith.addf %4, %3 : vector<16x128xf32>
    %6 = tpu.reciprocal %5 {approx = true} : vector<16x128xf32> -> vector<16x128xf32>
    %7 = arith.mulf %0, %6 : vector<16x128xf32>
    %c0_2 = arith.constant 0 : index
    %c0_3 = arith.constant 0 : index
    %8 = vector.load %arg2[%c0_2, %c0_3] : memref<16x128xf32, #tpu.memory_space<vmem>>, vector<16x128xf32>
    tpu.vector_store %arg2[%c0_2, %c0_3], %7 {strides = array<i32>} : memref<16x128xf32, #tpu.memory_space<vmem>>, vector<16x128xf32>,
    return
  }
  func.func @transform_0(%arg0: i32) -> (i32, i32) {
    %c0_i32 = arith.constant 0 : i32
    %c0_i32_0 = arith.constant 0 : i32
    return %arg0, %c0_i32 : i32, i32
  }
  func.func @transform_1(%arg0: i32) -> (i32, i32) {
    %c0_i32 = arith.constant 0 : i32
    %c0_i32_0 = arith.constant 0 : i32
    return %arg0, %c0_i32 : i32, i32
  }
}

</mosaic_0001>

<llo_original>
// kernel: tpu_custom_call.1
$region0: #{tpu_custom_call.1}
  #allocation0 [shape = 'u32[]', space=smem, size = 0x4, offset = 0x4, fixed_abs, tag = 'smem constant byte address 0x4 - core index']
  #allocation1 [shape = 'u32[72,128]{1,0:T(1,128)}', space=vmem, size = 0x9000, scoped, tag = 'internal scratch']
  %s0 = inlined_call_operand.hbm [shape: f32[16,128], index: 0, kind: input, shape index: {}]
  %s1 = inlined_call_operand.hbm [shape: f32[16,128], index: 1, kind: output, shape index: {}]
  %s2 = sld [smem:[#allocation0]]
  $region18: #{tpu_custom_call.1} parent=0
    _
  %s4 = ssub.s32 1, %s2
  %s5 = scalar_select 0, %s4, %s2
  $region1: #{tpu_custom_call.1} parent=0
    #allocation2 [shape = 'u8[8192]{0}', space=vmem, size = 0x2000, scoped, tag = 'input window, operand 0, single buffered']
    #allocation3 [shape = 's32[1]{0}', space=sflag, size = 0x4, scoped, tag = 'scoped memory for tpu_custom_call.1']
    #allocation4 [shape = 's32[1]{0}', space=sflag, size = 0x4, scoped, tag = 'scoped memory for tpu_custom_call.1']
    #allocation5 [shape = 'u8[8192]{0}', space=vmem, size = 0x2000, scoped, tag = 'output window, operand 0, single buffered']
    %6 = vsyncpa [#allocation3], 0
    %7 = vsyncpa [#allocation4], 0
    // Predicated region
    $region2: #{tpu_custom_call.1} parent=1 // pred_check
      _
    $region3: #{tpu_custom_call.1} parent=1 // pred_check_branch
      %9 = sbr.rel (0) target = $region5
    $region4: #{tpu_custom_call.1} parent=1 // pred_region
      %11 = vsyncadd [#allocation3], 0
      %s12 = sshll.u32 %s0, 4
      %s13 = int_to_ptr.hbm [resolvable:$true] %s12
      %s14 = sshll.u32 [#allocation2], 4
      %s15 = int_to_ptr.vmem [resolvable:$true] %s14
      %20 = dma.hbm_to_vmem [thread:$0]  %s13, 256, %s15, [#allocation3], 128, 128, 8
    $region5: #{tpu_custom_call.1} parent=1 // pred_fallthru
      _
    // Predicated region
    $region6: #{tpu_custom_call.1} parent=1 // pred_check
      _
    $region7: #{tpu_custom_call.1} parent=1 // pred_check_branch
      %22 = sbr.rel (0) target = $region9
    $region8: #{tpu_custom_call.1} parent=1 // pred_region
      %24 = dma.done [#allocation3], 256
    $region9: #{tpu_custom_call.1} parent=1 // pred_fallthru
      _
    %v25 = vld [vmem:[#allocation2] sm:$0xff]
    %v26 = vld [vmem:[#allocation2 + $0x8] sm:$0xff]
    %v27 = vsub.f32 0.0, %v25
    %v28 = vsub.f32 0.0, %v26
    %v29 = vmul.f32 %v27, 1.442695
    %v30 = vpow.pop %v29
    %v31 = vmul.f32 %v28, 1.442695
    %v32 = vpow.pop %v31
    %v33 = vadd.f32 %v30, 1.0
    %v34 = vadd.f32 %v32, 1.0
    %v35 = vrcp.pop %v33
    %v36 = vrcp.pop %v34
    %v37 = vmul.f32 %v25, %v35
    %v38 = vmul.f32 %v26, %v36
    %39 = vst [vmem:[#allocation5] sm:$0xff] %v37
    %40 = vst [vmem:[#allocation5 + $0x8] sm:$0xff] %v38
    // Predicated region
    $region10: #{tpu_custom_call.1} parent=1 // pred_check
      _
    $region11: #{tpu_custom_call.1} parent=1 // pred_check_branch
      %42 = sbr.rel (0) target = $region13
    $region12: #{tpu_custom_call.1} parent=1 // pred_region
      %44 = vsyncadd [#allocation4], 0
      %s45 = sshll.u32 [#allocation5], 4
      %s46 = int_to_ptr.vmem [resolvable:$true] %s45
      %s47 = sshll.u32 %s1, 4
      %s48 = int_to_ptr.hbm [resolvable:$true] %s47
      %53 = dma.vmem_to_hbm [thread:$0]  %s46, 256, %s48, [#allocation4], 128, 128, 8
    $region13: #{tpu_custom_call.1} parent=1 // pred_fallthru
      _
    // Predicated region
    $region14: #{tpu_custom_call.1} parent=1 // pred_check
      _
    $region15: #{tpu_custom_call.1} parent=1 // pred_check_branch
      %55 = sbr.rel (0) target = $region17
    $region16: #{tpu_custom_call.1} parent=1 // pred_region
      %57 = dma.done [#allocation4], 256
    $region17: #{tpu_custom_call.1} parent=1 // pred_fallthru
      _
    %58 = vsyncpa [#allocation3], 1
    %59 = vsyncpa [#allocation4], 1

</llo_original>
